<compile_context>
chip_gen: v5e
topology: v5e:2x2
jax: 0.10.0
libtpu: 0.0.40
codegen_flags: <defaults>
</compile_context>

<pallas_src>
import functools

import jax
import jax.numpy as jnp
from jax import lax
from jax.experimental import pallas as pl
from jax.experimental.pallas import tpu as pltpu

_EPS = 1e-5   # PyTorch default for BatchNorm3d / InstanceNorm3d


# ----------------------------------------------------------------------------
# Generation-aware budgets & tile pickers
# ----------------------------------------------------------------------------
def _vmem_budget_bytes():
    """Scoped-VMEM budget derived from the physical VMEM of this TPU gen."""
    try:
        phys = int(pltpu.get_tpu_info().vmem_capacity_bytes)
    except Exception:                      # fallback: assume smallest (v7x, 64 MiB/TC)
        phys = 64 * 1024 * 1024
    return max(16 * 1024 * 1024, (phys * 3) // 4)


def _sublane(dtype):
    """Sublane packing granularity: 8 rows for 32-bit, 16 for 16-bit, 32 for 8-bit."""
    return 8 * max(1, 4 // jnp.dtype(dtype).itemsize)


def _max_tile_elems(dtype, vmem_limit):
    """Largest per-tile element count for the tiled (stats / apply) passes.

    Worst case is the apply pass: 2 double-buffered input tiles + 2 output
    tiles (+ one f32 temp when math is widened from a sub-32-bit dtype).
    """
    in_b = jnp.dtype(dtype).itemsize
    per_elem = 4 * in_b + (4 if in_b < 4 else 0)
    return max(_sublane(dtype) * 128, int(vmem_limit * 0.6) // per_elem)


def _pick_row_tile(R, cap_rows, sublane, min_blocks=1):
    """Largest multiple of `sublane` that divides R, is <= cap_rows, and (when
    possible) leaves at least `min_blocks` row blocks on the parallel axis."""
    if R % sublane != 0:
        if R % 8 == 0:
            sublane = 8                    # fall back to 32-bit sublane granularity
        else:
            return R                       # full-dim block is always legal
    cap = min(cap_rows, R)
    if min_blocks > 1:
        cap = min(cap, max(sublane, R // min_blocks))
    cap = max(cap, sublane)
    best = sublane
    t = sublane
    while t <= cap:
        if R % t == 0:
            best = t
        t += sublane
    return best


def _pick_feat_tile(L, cap_feats):
    """Largest multiple of 128 that divides L (requires L % 128 == 0) and is
    <= cap_feats."""
    M = L // 128
    cap_d = max(1, min(M, cap_feats // 128))
    best, d = 1, 1
    while d * d <= M:
        if M % d == 0:
            for cand in (d, M // d):
                if best < cand <= cap_d:
                    best = cand
        d += 1
    return 128 * best


def _two_pass_tiles(R, L, dtype, vmem_limit):
    """(RT, LT) for the tiled stats / apply passes."""
    sub = _sublane(dtype)
    max_elems = _max_tile_elems(dtype, vmem_limit)
    if L % 128 == 0:
        RT = _pick_row_tile(R, 256, sub, min_blocks=2)
        LT = _pick_feat_tile(L, max(128, max_elems // RT))
    else:
        # Full-L feature block; force the row tile down so the block fits VMEM.
        RT = _pick_row_tile(R, max(sub, max_elems // max(1, L)), sub, min_blocks=2)
        LT = L
    return RT, LT


def _maybe_pad_features(x2d, vmem_limit):
    """Zero-pad the feature dim up to a multiple of 128 only when a full-L
    block with the minimum row tile would not fit the VMEM budget (very large
    odd L). Zero columns contribute nothing to sum / sum-of-squares."""
    R, L = x2d.shape
    if L % 128 == 0:
        return x2d
    if _sublane(x2d.dtype) * L <= _max_tile_elems(x2d.dtype, vmem_limit):
        return x2d                         # full-L blocks are safe; avoid the copy
    Lp = ((L + 127) // 128) * 128
    return jnp.pad(x2d, ((0, 0), (0, Lp - L)))


def _fused_row_tile(R, L, dtype, vmem_limit):
    """Row tile for the fused single-pass kernel, or None if no row tile fits."""
    sub = _sublane(dtype)
    in_b = jnp.dtype(dtype).itemsize
    # 2 double-buffered input row tiles + 2 output row tiles + ~2 f32 temps
    # (covers the implicit f32 widening of bf16 inputs).
    per_elem = 4 * in_b + 8
    budget_rows = int(vmem_limit * 0.8) // max(1, per_elem * L)
    min_rt = sub if R % sub == 0 else (8 if R % 8 == 0 else R)
    if budget_rows < min_rt:
        return None
    return _pick_row_tile(R, budget_rows, sub, min_blocks=4)


# ----------------------------------------------------------------------------
# Kernel 1: per-row sum and sum-of-squares. Row axis is "parallel" (megacore),
# feature axis is last and "arbitrary"; the (RT, 1) outputs stay resident in
# VMEM across the feature axis.
# TODO(synk): lane-parallel (RT,128) scratch accumulation (perf-review item) is
#             intentionally skipped — this pass is HBM-bound.
# ----------------------------------------------------------------------------
def _stats_kernel(x_ref, sum_ref, ssq_ref):
    @pl.when(pl.program_id(1) == 0)
    def _():
        sum_ref[...] = jnp.zeros_like(sum_ref)
        ssq_ref[...] = jnp.zeros_like(ssq_ref)

    x = x_ref[...].astype(jnp.float32)
    sum_ref[...] += jnp.sum(x, axis=-1, keepdims=True)
    ssq_ref[...] += jnp.sum(x * x, axis=-1, keepdims=True)


def _row_stats(x2d, vmem_limit):
    R, L = x2d.shape
    RT, LT = _two_pass_tiles(R, L, x2d.dtype, vmem_limit)
    grid = (R // RT, L // LT)
    return pl.pallas_call(
        _stats_kernel,
        out_shape=(jax.ShapeDtypeStruct((R, 1), jnp.float32),
                   jax.ShapeDtypeStruct((R, 1), jnp.float32)),
        grid_spec=pltpu.PrefetchScalarGridSpec(
            num_scalar_prefetch=0,
            grid=grid,
            in_specs=[pl.BlockSpec((RT, LT), lambda r, l: (r, l))],
            out_specs=[pl.BlockSpec((RT, 1), lambda r, l: (r, 0)),
                       pl.BlockSpec((RT, 1), lambda r, l: (r, 0))]),
        compiler_params=pltpu.CompilerParams(
            dimension_semantics=("parallel", "arbitrary"),
            vmem_limit_bytes=vmem_limit),
    )(x2d)


# ----------------------------------------------------------------------------
# Kernel 2: apply pass — one FMA per element: y = x*scale_row + shift_row.
# ----------------------------------------------------------------------------
def _apply_kernel(x_ref, scale_ref, shift_ref, o_ref):
    x = x_ref[...].astype(jnp.float32)
    o_ref[...] = (x * scale_ref[...] + shift_ref[...]).astype(o_ref.dtype)


def _apply_affine(x2d, scale, shift, vmem_limit):
    R, L = x2d.shape
    RT, LT = _two_pass_tiles(R, L, x2d.dtype, vmem_limit)
    grid = (R // RT, L // LT)
    return pl.pallas_call(
        _apply_kernel,
        out_shape=jax.ShapeDtypeStruct((R, L), x2d.dtype),
        grid_spec=pltpu.PrefetchScalarGridSpec(
            num_scalar_prefetch=0,
            grid=grid,
            in_specs=[pl.BlockSpec((RT, LT), lambda r, l: (r, l)),
                      pl.BlockSpec((RT, 1), lambda r, l: (r, 0)),
                      pl.BlockSpec((RT, 1), lambda r, l: (r, 0))],
            out_specs=pl.BlockSpec((RT, LT), lambda r, l: (r, l))),
        compiler_params=pltpu.CompilerParams(
            dimension_semantics=("parallel", "parallel"),
            vmem_limit_bytes=vmem_limit),
    )(x2d, scale, shift)


# ----------------------------------------------------------------------------
# Fused single-pass row norm (no affine) — used whenever full (RT, L) row tiles
# fit the VMEM budget. Reads x from HBM exactly once; uses centered variance.
# ----------------------------------------------------------------------------
def _fused_rownorm_kernel(x_ref, o_ref, *, eps, inv_l):
    x = x_ref[...].astype(jnp.float32)
    mean = jnp.sum(x, axis=-1, keepdims=True) * inv_l
    xc = x - mean
    var = jnp.sum(xc * xc, axis=-1, keepdims=True) * inv_l
    o_ref[...] = (xc * lax.rsqrt(var + eps)).astype(o_ref.dtype)


def _fused_rownorm(x2d, RT, eps, vmem_limit):
    R, L = x2d.shape
    kernel = functools.partial(_fused_rownorm_kernel, eps=eps, inv_l=1.0 / L)
    return pl.pallas_call(
        kernel,
        out_shape=jax.ShapeDtypeStruct((R, L), x2d.dtype),
        grid_spec=pltpu.PrefetchScalarGridSpec(
            num_scalar_prefetch=0,
            grid=(R // RT,),
            in_specs=[pl.BlockSpec((RT, L), lambda r: (r, 0))],
            out_specs=pl.BlockSpec((RT, L), lambda r: (r, 0))),
        compiler_params=pltpu.CompilerParams(
            dimension_semantics=("parallel",),
            vmem_limit_bytes=vmem_limit),
    )(x2d)


# ----------------------------------------------------------------------------
# Norm variants
# ----------------------------------------------------------------------------
def _instance_two_pass(x2d, l_valid, eps, vmem_limit):
    """Two-pass (stats + apply) instance norm; x2d may be zero-padded past l_valid."""
    s, ssq = _row_stats(x2d, vmem_limit)                   # (R, 1) f32
    mean = s / l_valid
    var = jnp.maximum(ssq / l_valid - mean * mean, 0.0)
    scale = lax.rsqrt(var + eps)
    shift = -mean * scale
    return _apply_affine(x2d, scale, shift, vmem_limit)


def instance_norm_3d(x, eps=_EPS):
    """nn.InstanceNorm3d(C) defaults: affine=False, eps=1e-5, biased variance."""
    N, C, D, H, W = x.shape
    R, L = N * C, D * H * W
    x2d = x.reshape(R, L)
    vmem_limit = _vmem_budget_bytes()
    RT = _fused_row_tile(R, L, x2d.dtype, vmem_limit)
    if RT is not None:                         # single HBM read of x (2 passes total)
        y2d = _fused_rownorm(x2d, RT, eps, vmem_limit)
    else:                                      # rows too large: tiled stats + apply
        x2p = _maybe_pad_features(x2d, vmem_limit)
        y2p = _instance_two_pass(x2p, float(L), eps, vmem_limit)
        y2d = y2p[:, :L] if y2p.shape[1] != L else y2p
    return y2d.reshape(N, C, D, H, W)


def batch_norm_3d(x, weight, bias, eps=_EPS):
    """nn.BatchNorm3d(C) training mode: per-channel batch stats + affine.

    No full-tensor transpose: per-(N,C)-row partial sums come from the tiled
    stats kernel, are combined across N in tiny plain-JAX math, and applied
    with one FMA per element.
    """
    N, C, D, H, W = x.shape
    R, L = N * C, D * H * W
    vmem_limit = _vmem_budget_bytes()
    x2d = _maybe_pad_features(x.reshape(R, L), vmem_limit)

    s, ssq = _row_stats(x2d, vmem_limit)                   # (R, 1) partials, f32
    s = s.reshape(N, C)
    ssq = ssq.reshape(N, C)
    cnt = float(N * L)
    mean_c = jnp.sum(s, axis=0) / cnt                      # (C,)
    var_c = jnp.maximum(jnp.sum(ssq, axis=0) / cnt - mean_c * mean_c, 0.0)
    inv_c = lax.rsqrt(var_c + eps)
    scale_c = weight.astype(jnp.float32) * inv_c           # gamma * rsqrt(var+eps)
    shift_c = bias.astype(jnp.float32) - mean_c * scale_c  # beta - mean*scale

    scale = jnp.broadcast_to(scale_c[None, :], (N, C)).reshape(R, 1)
    shift = jnp.broadcast_to(shift_c[None, :], (N, C)).reshape(R, 1)
    y2d = _apply_affine(x2d, scale, shift, vmem_limit)
    if y2d.shape[1] != L:
        y2d = y2d[:, :L]
    return y2d.reshape(N, C, D, H, W)


class Normalization:
    """JAX/Pallas counterpart of the PyTorch `Normalization` module."""

    def __init__(self, cfg, n_channels):
        self.cfg = cfg
        self.norm_type = cfg['MODEL']['NORM']
        self.n_channels = n_channels
        if self.norm_type == 'batch':
            # nn.BatchNorm3d defaults: weight = 1, bias = 0.
            self.weight = jnp.ones((n_channels,), jnp.float32)
            self.bias = jnp.zeros((n_channels,), jnp.float32)

    def __call__(self, x):
        if self.norm_type == 'batch':
            return batch_norm_3d(x, self.weight, self.bias)
        elif self.norm_type == 'instance':
            return instance_norm_3d(x)
        elif self.norm_type == 'none':
            return x
        else:
            raise ValueError(f"unknown norm type {self.norm_type}")


# ----------------------------------------------------------------------------
# Pure-JAX references for sanity checking
# ----------------------------------------------------------------------------
def _instance_norm_ref(x):
    m = jnp.mean(x, axis=(2, 3, 4), keepdims=True)
    v = jnp.mean((x - m) ** 2, axis=(2, 3, 4), keepdims=True)
    return (x - m) / jnp.sqrt(v + _EPS)


def _batch_norm_ref(x, w, b):
    m = jnp.mean(x, axis=(0, 2, 3, 4), keepdims=True)
    v = jnp.mean((x - m) ** 2, axis=(0, 2, 3, 4), keepdims=True)
    y = (x - m) / jnp.sqrt(v + _EPS)
    return y * w.reshape(1, -1, 1, 1, 1) + b.reshape(1, -1, 1, 1, 1)


if __name__ == "__main__":
    key = jax.random.PRNGKey(0)
    k1, k2 = jax.random.split(key)
    vmem = _vmem_budget_bytes()

    # ---- 128-multiple feature dim ------------------------------------------
    N, C, D, H, W = 2, 4, 8, 8, 8
    x = jax.random.normal(k1, (N, C, D, H, W), dtype=jnp.float32)

    cfg_inst = {'MODEL': {'NORM': 'instance', 'N_CHANNELS_PER_GROUP': 4}}
    y_inst = jax.block_until_ready(Normalization(cfg_inst, C)(x))
    assert jnp.allclose(y_inst, _instance_norm_ref(x), atol=1e-4), "instance norm mismatch"

    # also exercise the tiled two-pass (stats + apply) path used for huge rows
    y_inst2 = jax.block_until_ready(
        _instance_two_pass(x.reshape(N * C, D * H * W), float(D * H * W), _EPS, vmem))
    assert jnp.allclose(y_inst2.reshape(x.shape), _instance_norm_ref(x),
                        atol=1e-4), "two-pass instance mismatch"

    cfg_bn = {'MODEL': {'NORM': 'batch', 'N_CHANNELS_PER_GROUP': 4}}
    bn = Normalization(cfg_bn, C)
    y_bn = jax.block_until_ready(bn(x))
    assert jnp.allclose(y_bn, _batch_norm_ref(x, bn.weight, bn.bias),
                        atol=1e-4), "batch norm mismatch"

    cfg_none = {'MODEL': {'NORM': 'none', 'N_CHANNELS_PER_GROUP': 4}}
    y_id = jax.block_until_ready(Normalization(cfg_none, C)(x))
    assert jnp.allclose(y_id, x), "identity mismatch"

    # ---- odd (non-128-multiple) feature dim (L = 5*6*7 = 210) ----------------
    xo = jax.random.normal(k2, (2, 4, 5, 6, 7), dtype=jnp.float32)
    y_io = jax.block_until_ready(Normalization(cfg_inst, 4)(xo))
    assert jnp.allclose(y_io, _instance_norm_ref(xo), atol=1e-4), "odd-L instance mismatch"

    bn_o = Normalization(cfg_bn, 4)
    y_bo = jax.block_until_ready(bn_o(xo))
    assert jnp.allclose(y_bo, _batch_norm_ref(xo, bn_o.weight, bn_o.bias),
                        atol=1e-4), "odd-L batch norm mismatch"

    # zero-padded two-pass fallback (used for very large odd feature dims)
    Lo = 5 * 6 * 7
    x2p = jnp.pad(xo.reshape(8, Lo), ((0, 0), (0, 256 - Lo)))
    y2p = jax.block_until_ready(_instance_two_pass(x2p, float(Lo), _EPS, vmem))[:, :Lo]
    assert jnp.allclose(y2p.reshape(xo.shape), _instance_norm_ref(xo),
                        atol=1e-4), "padded two-pass mismatch"

    print("KERNEL_OK")
</pallas_src>

<mosaic_0001>
module attributes {stable_mosaic.version = 11 : i64} {
  func.func @_fused_rownorm_kernel(%arg0: i32, %arg1: memref<8x512xf32, #tpu.memory_space<vmem>>, %arg2: memref<8x512xf32, #tpu.memory_space<vmem>>) attributes {dimension_semantics = [#tpu.dimension_semantics<parallel>], iteration_bounds = array<i64: 1>, scalar_prefetch = 0 : i64, scratch_operands = 0 : i64, tpu.core_type = #tpu.core_type<tc>, window_params = [{transform_indices = @transform_0, window_bounds = array<i64: 8, 512>}, {transform_indices = @transform_1, window_bounds = array<i64: 8, 512>}]} {
    %c0 = arith.constant 0 : index
    %c0_0 = arith.constant 0 : index
    %0 = vector.load %arg1[%c0, %c0_0] : memref<8x512xf32, #tpu.memory_space<vmem>>, vector<8x512xf32>
    %cst = arith.constant dense<0.000000e+00> : vector<8xf32>
    %1 = vector.multi_reduction <add>, %0, %cst [1] : vector<8x512xf32> to vector<8xf32>
    %2 = vector.shape_cast %1 : vector<8xf32> to vector<8x1xf32>
    %cst_1 = arith.constant 0.001953125 : f32
    %3 = vector.broadcast %cst_1 : f32 to vector<8x1xf32>
    %4 = arith.mulf %2, %3 : vector<8x1xf32>
    %5 = vector.broadcast %4 : vector<8x1xf32> to vector<8x512xf32>
    %6 = arith.subf %0, %5 : vector<8x512xf32>
    %7 = arith.mulf %6, %6 : vector<8x512xf32>
    %cst_2 = arith.constant dense<0.000000e+00> : vector<8xf32>
    %8 = vector.multi_reduction <add>, %7, %cst_2 [1] : vector<8x512xf32> to vector<8xf32>
    %9 = vector.shape_cast %8 : vector<8xf32> to vector<8x1xf32>
    %cst_3 = arith.constant 0.001953125 : f32
    %10 = vector.broadcast %cst_3 : f32 to vector<8x1xf32>
    %11 = arith.mulf %9, %10 : vector<8x1xf32>
    %cst_4 = arith.constant 9.99999974E-6 : f32
    %12 = vector.broadcast %cst_4 : f32 to vector<8x1xf32>
    %13 = arith.addf %11, %12 : vector<8x1xf32>
    %14 = math.rsqrt %13 : vector<8x1xf32>
    %15 = vector.broadcast %14 : vector<8x1xf32> to vector<8x512xf32>
    %16 = arith.mulf %6, %15 : vector<8x512xf32>
    %c0_5 = arith.constant 0 : index
    %c0_6 = arith.constant 0 : index
    %17 = vector.load %arg2[%c0_5, %c0_6] : memref<8x512xf32, #tpu.memory_space<vmem>>, vector<8x512xf32>
    tpu.vector_store %arg2[%c0_5, %c0_6], %16 {strides = array<i32>} : memref<8x512xf32, #tpu.memory_space<vmem>>, vector<8x512xf32>,
    return
  }
  func.func @transform_0(%arg0: i32) -> (i32, i32) {
    %c0_i32 = arith.constant 0 : i32
    %c0_i32_0 = arith.constant 0 : i32
    return %arg0, %c0_i32 : i32, i32
  }
  func.func @transform_1(%arg0: i32) -> (i32, i32) {
    %c0_i32 = arith.constant 0 : i32
    %c0_i32_0 = arith.constant 0 : i32
    return %arg0, %c0_i32 : i32, i32
  }
}

</mosaic_0001>

<llo_original>
// kernel: tpu_custom_call.1
$region0: #{tpu_custom_call.1}
  #allocation0 [shape = 'u32[]', space=smem, size = 0x4, offset = 0x4, fixed_abs, tag = 'smem constant byte address 0x4 - core index']
  #allocation1 [shape = 'u32[72,128]{1,0:T(1,128)}', space=vmem, size = 0x9000, scoped, tag = 'internal scratch']
  %s0 = inlined_call_operand.hbm [shape: f32[8,512], index: 0, kind: input, shape index: {}]
  %s1 = inlined_call_operand.hbm [shape: f32[8,512], index: 1, kind: output, shape index: {}]
  %s2 = sld [smem:[#allocation0]]
  $region18: #{tpu_custom_call.1} parent=0
    _
  %s4 = ssub.s32 1, %s2
  %s5 = scalar_select 0, %s4, %s2
  $region1: #{tpu_custom_call.1} parent=0
    #allocation2 [shape = 'u8[16384]{0}', space=vmem, size = 0x4000, scoped, tag = 'input window, operand 0, single buffered']
    #allocation3 [shape = 's32[1]{0}', space=sflag, size = 0x4, scoped, tag = 'scoped memory for tpu_custom_call.1']
    #allocation4 [shape = 's32[1]{0}', space=sflag, size = 0x4, scoped, tag = 'scoped memory for tpu_custom_call.1']
    #allocation5 [shape = 'u8[16384]{0}', space=vmem, size = 0x4000, scoped, tag = 'output window, operand 0, single buffered']
    %6 = vsyncpa [#allocation3], 0
    %7 = vsyncpa [#allocation4], 0
    // Predicated region
    $region2: #{tpu_custom_call.1} parent=1 // pred_check
      _
    $region3: #{tpu_custom_call.1} parent=1 // pred_check_branch
      %9 = sbr.rel (0) target = $region5
    $region4: #{tpu_custom_call.1} parent=1 // pred_region
      %11 = vsyncadd [#allocation3], 0
      %s13 = sshll.u32 %s0, 4
      %s14 = int_to_ptr.hbm [resolvable:$true] %s13
      %s15 = sshll.u32 [#allocation2], 4
      %s16 = int_to_ptr.vmem [resolvable:$true] %s15
      %18 = dma.hbm_to_vmem [thread:$0]  %s14, 512, %s16, [#allocation3]
    $region5: #{tpu_custom_call.1} parent=1 // pred_fallthru
      _
    // Predicated region
    $region6: #{tpu_custom_call.1} parent=1 // pred_check
      _
    $region7: #{tpu_custom_call.1} parent=1 // pred_check_branch
      %20 = sbr.rel (0) target = $region9
    $region8: #{tpu_custom_call.1} parent=1 // pred_region
      %22 = dma.done [#allocation3], 512
    $region9: #{tpu_custom_call.1} parent=1 // pred_fallthru
      _
    %v23 = vld [vmem:[#allocation2] sm:$0xff]
    %v24 = vld [vmem:[#allocation2 + $0x8] sm:$0xff]
    %v25 = vld [vmem:[#allocation2 + $0x10] sm:$0xff]
    %v26 = vld [vmem:[#allocation2 + $0x18] sm:$0xff]
    %v27 = vadd.f32 %v23, %v24
    %v28 = vadd.f32 %v27, %v25
    %v29 = vadd.f32 %v28, %v26
    %30 = vadd.xlane.f32.xlu0 %v29
    %v31 = vpop.xlane.xlu0 %30
    %v32 = vmul.f32 %v31, 0.001953125
    %v33 = vsub.f32 %v23, %v32
    %v34 = vsub.f32 %v24, %v32
    %v35 = vsub.f32 %v25, %v32
    %v36 = vsub.f32 %v26, %v32
    %v37 = vmul.f32 %v33, %v33
    %v38 = vmul.f32 %v34, %v34
    %v39 = vmul.f32 %v35, %v35
    %v40 = vmul.f32 %v36, %v36
    %v41 = vadd.f32 %v37, %v38
    %v42 = vadd.f32 %v41, %v39
    %v43 = vadd.f32 %v42, %v40
    %44 = vadd.xlane.f32.xlu0 %v43
    %v45 = vpop.xlane.xlu0 %44
    %v46 = vmul.f32 %v45, 0.001953125
    %v47 = vadd.f32 %v46, 1e-05
    %v48 = vrsqrt.pop %v47
    %v49 = vmul.f32 %v48, %v47
    %v50 = vmul.f32 %v49, %v48
    %v51 = vmul.f32 0.5, %v50
    %v52 = vsub.f32 1.5, %v51
    %v53 = vmul.f32 %v48, %v52
    %vm54 = vweird.f32 %v47
    %vm55 = vweird.f32 %v48
    %vm56 = vmor %vm54, %vm55
    %v57 = vsel %vm56, %v48, %v53
    %v58 = vmul.f32 %v33, %v57
    %v59 = vmul.f32 %v34, %v57
    %v60 = vmul.f32 %v35, %v57
    %v61 = vmul.f32 %v36, %v57
    %62 = vst [vmem:[#allocation5] sm:$0xff] %v58
    %63 = vst [vmem:[#allocation5 + $0x8] sm:$0xff] %v59
    %64 = vst [vmem:[#allocation5 + $0x10] sm:$0xff] %v60
    %65 = vst [vmem:[#allocation5 + $0x18] sm:$0xff] %v61
    // Predicated region
    $region10: #{tpu_custom_call.1} parent=1 // pred_check
      _
    $region11: #{tpu_custom_call.1} parent=1 // pred_check_branch
      %67 = sbr.rel (0) target = $region13
    $region12: #{tpu_custom_call.1} parent=1 // pred_region
      %69 = vsyncadd [#allocation4], 0
      %s71 = sshll.u32 [#allocation5], 4
      %s72 = int_to_ptr.vmem [resolvable:$true] %s71
      %s73 = sshll.u32 %s1, 4
      %s74 = int_to_ptr.hbm [resolvable:$true] %s73
      %76 = dma.vmem_to_hbm [thread:$0]  %s72, 512, %s74, [#allocation4]
    $region13: #{tpu_custom_call.1} parent=1 // pred_fallthru
      _
    // Predicated region
    $region14: #{tpu_custom_call.1} parent=1 // pred_check
      _
    $region15: #{tpu_custom_call.1} parent=1 // pred_check_branch
      %78 = sbr.rel (0) target = $region17
    $region16: #{tpu_custom_call.1} parent=1 // pred_region
      %80 = dma.done [#allocation4], 512
    $region17: #{tpu_custom_call.1} parent=1 // pred_fallthru
      _
    %81 = vsyncpa [#allocation3], 1
    %82 = vsyncpa [#allocation4], 1

</llo_original>
